<compile_context>
chip_gen: v6e
topology: v6e:2x2x1
jax: 0.10.0
libtpu: 0.0.40
codegen_flags: <defaults>
</compile_context>

<pallas_src>
import jax
import jax.numpy as jnp
from jax.experimental import pallas as pl
from jax.experimental.pallas import tpu as pltpu

# ---- model configuration (mirrors the module __init__) ----
EMBEDDING_DIM = 8
HIDDEN_UNITS = [64, 32]                                   # config.hidden_units
NUM_DENSE = 13
NUM_SPARSE = 26
VOCAB_SIZES = [64 + 3 * i for i in range(NUM_SPARSE)]     # get_sparse_fea_num() stand-in
INPUTS_DIM = NUM_DENSE + NUM_SPARSE * EMBEDDING_DIM       # 221

D_PAD = 256                                               # padded feature dim (lane-aligned)
H1, H2 = HIDDEN_UNITS
N_PAD = 128                                               # fused output / padded hidden width
COL_H1 = 0                                                # fused cols [0,64): dnn layer-1 pre-act
COL_XV = H1                                               # fused cols [64,72): X @ fm_w2
COL_FO = H1 + EMBEDDING_DIM                               # fused col 72: X @ fm_w1 (+w0+final_b)

TB_MAX = 2048                                             # max batch-tile rows (fits v7x VMEM)
SINGLE_STEP_MAX = 512                                     # above this, force >=2 grid steps (v7x megacore)


# -------------------------- Pallas kernel ---------------------------------
def _deepfm_kernel(x_ref,        # (TB, 256) bf16
                   wfused_ref,   # (256, 128) bf16  [dnn_w1 | fm_w2 | fm_w1 | 0]
                   bfused_ref,   # (1, 128)  f32    [dnn_b1 | 0 | fm_w0+final_b | 0]
                   v_ref,        # (1, 256)  f32    row-sum of fm_w2^2 (padded)
                   w2_ref,       # (64, 128) bf16   dnn layer 2, cols >=32 zero
                   b2_ref,       # (1, 128)  f32
                   wf_ref,       # (1, 128)  f32    final linear weight row, cols >=32 zero
                   out_ref):     # (8, TB//8) f32 lane-dense, or (TB, 1) f32 fallback
    x_bf = x_ref[...]
    x_f32 = x_bf.astype(jnp.float32)

    # one fused MXU pass over K=256 for all x-sided projections
    z = jnp.dot(x_bf, wfused_ref[...], preferred_element_type=jnp.float32)
    z = z + bfused_ref[...]

    h1 = jnp.maximum(z[:, COL_H1:COL_H1 + H1], 0.0)          # (TB, 64)  dnn hidden 1
    xv = z[:, COL_XV:COL_XV + EMBEDDING_DIM]                 # (TB, 8)   X @ fm_w2
    first = z[:, COL_FO:COL_FO + 1]                          # (TB, 1)   w0 + X@w1 + final_b

    # FM second order: 0.5*(sum_k (x.w2_k)^2 - sum_d x_d^2 * sum_k w2_dk^2)  (VPU+XLU, no MXU)
    # kept in f32: v5e's VPU/EUP have no bf16, and VALU has slack under the MXU cadence.
    x2v = jnp.sum(x_f32 * x_f32 * v_ref[...], axis=-1, keepdims=True)
    second = 0.5 * (jnp.sum(xv * xv, axis=-1, keepdims=True) - x2v)

    # DNN layer 2 (padded to 128 lanes; padded cols are exactly zero)
    h2 = jnp.dot(h1.astype(jnp.bfloat16), w2_ref[...],
                 preferred_element_type=jnp.float32) + b2_ref[...]
    h2 = jnp.maximum(h2, 0.0)
    # TODO(synk): nn.Dropout is identity at inference time; no-op here.

    # final N=1 linear as VPU multiply + cross-lane reduce (bias already folded into `first`)
    dnn_out = jnp.sum(h2 * wf_ref[...], axis=-1, keepdims=True)

    res = jax.nn.sigmoid(first + second + dnn_out)           # (TB, 1) f32
    # Lane-dense store: row j of the tile lands at flat position j of the tile's output
    # block (row-major), so the wrapper can just reshape(-1).  In the fallback path
    # out_ref.shape == (TB, 1) and this reshape is a no-op.
    out_ref[...] = res.reshape(out_ref.shape)


# -------------------------- helpers ----------------------------------------
def _round_up(n, m):
    return (n + m - 1) // m * m


def _cdiv(a, b):
    return (a + b - 1) // b


def _choose_tiles(batch):
    """Pick (tb, b_pad, n_steps): big tiles (amortize ~0.35us/step), minimal padding,
    >= 2 steps for batch > SINGLE_STEP_MAX so both v7x TensorCores get work."""
    if batch <= SINGLE_STEP_MAX:
        tb = _round_up(batch, 8)
        return tb, tb, 1
    n_steps = max(2, _cdiv(batch, TB_MAX))
    tb = min(TB_MAX, _round_up(_cdiv(batch, n_steps), 8))
    b_pad = _round_up(batch, tb)
    return tb, b_pad, b_pad // tb


def _vmem_limit_bytes(tb):
    """Scoped-VMEM budget from actual buffer sizes + headroom (review: don't hardcode)."""
    weights = 2 * ((D_PAD * N_PAD + H1 * N_PAD) * 2 + (3 * N_PAD + D_PAD) * 4)  # double-buffered
    x_tile = 2 * tb * D_PAD * 2                 # double-buffered bf16 x tile
    out_tile = 2 * tb * 128 * 4                 # worst case (column-output path, lane-padded)
    temps = tb * 4096                           # f32 body temporaries (x_f32, z, h1, h2, ...)
    total = weights + x_tile + out_tile + temps + (8 << 20)   # + compiler scratch headroom
    # floor at the known-good 32 MiB (v5e scoped default is only 16 MiB); at tb<=2048 this
    # stays far below v7x's 64 MiB physical VMEM.
    return max(total, 32 << 20)


def prepare_params(params):
    """One-time weight prep: merged bf16 embedding table + fused/padded/bf16 matmul weights."""
    d = INPUTS_DIM
    # bf16 table: gather-then-cast == cast-then-gather, and halves gather output traffic.
    emb_table = jnp.concatenate(params["emb"], axis=0).astype(jnp.bfloat16)     # (sum_vocab, 8)
    vocab = jnp.array(VOCAB_SIZES, jnp.int32)
    emb_offsets = jnp.concatenate(
        [jnp.zeros((1,), jnp.int32), jnp.cumsum(vocab)[:-1]]).astype(jnp.int32)

    w_fused = jnp.zeros((D_PAD, N_PAD), jnp.float32)
    w_fused = w_fused.at[:d, COL_H1:COL_H1 + H1].set(params["dnn_w1"])
    w_fused = w_fused.at[:d, COL_XV:COL_XV + EMBEDDING_DIM].set(params["fm_w2"])
    w_fused = w_fused.at[:d, COL_FO:COL_FO + 1].set(params["fm_w1"])

    b_fused = jnp.zeros((1, N_PAD), jnp.float32)
    b_fused = b_fused.at[0, COL_H1:COL_H1 + H1].set(params["dnn_b1"][0])
    b_fused = b_fused.at[0, COL_FO].set(params["fm_w0"][0, 0] + params["final_b"][0, 0])

    v = jnp.zeros((1, D_PAD), jnp.float32)
    v = v.at[0, :d].set(jnp.sum(params["fm_w2"] ** 2, axis=1))

    w2p = jnp.zeros((H1, N_PAD), jnp.float32).at[:, :H2].set(params["dnn_w2"])
    b2p = jnp.zeros((1, N_PAD), jnp.float32).at[0, :H2].set(params["dnn_b2"][0])
    wfp = jnp.zeros((1, N_PAD), jnp.float32).at[0, :H2].set(params["final_w"][:, 0])

    return dict(emb_table=emb_table, emb_offsets=emb_offsets,
                w_fused=w_fused.astype(jnp.bfloat16),
                b_fused=b_fused, v=v,
                w2p=w2p.astype(jnp.bfloat16),
                b2p=b2p, wfp=wfp)


# -------------------------- forward wrappers --------------------------------
def _build_forward(lane_dense):
    @jax.jit
    def forward(inputs, prep):
        batch = inputs.shape[0]
        tb, b_pad, n_steps = _choose_tiles(batch)   # NOTE: new batch size => new compile; bucket in serving.

        dense = inputs[:, :NUM_DENSE].astype(jnp.bfloat16)
        sparse = inputs[:, NUM_DENSE:].astype(jnp.int32)

        # single flat gather over the merged offset-indexed bf16 embedding table
        idx = (sparse + prep["emb_offsets"][None, :]).reshape(-1)
        emb = jnp.take(prep["emb_table"], idx, axis=0).reshape(batch, NUM_SPARSE * EMBEDDING_DIM)

        # Build the padded bf16 activation directly (one (b_pad, 256) materialization;
        # no intermediate f32 concat + separate pad/cast pass).
        x = jnp.zeros((b_pad, D_PAD), jnp.bfloat16)
        x = x.at[:batch, :NUM_DENSE].set(dense)
        x = x.at[:batch, NUM_DENSE:INPUTS_DIM].set(emb)
        # TODO(synk): gathering the ~84 KiB table inside the kernel (pass indices + dense per
        # tile) would remove this (b_pad, 256) HBM round trip entirely; kept in XLA for now.

        resident = lambda i: (0, 0)   # constant block index -> weights stay VMEM-resident
        in_specs = [
            pl.BlockSpec((tb, D_PAD), lambda i: (i, 0)),
            pl.BlockSpec((D_PAD, N_PAD), resident),
            pl.BlockSpec((1, N_PAD), resident),
            pl.BlockSpec((1, D_PAD), resident),
            pl.BlockSpec((H1, N_PAD), resident),
            pl.BlockSpec((1, N_PAD), resident),
            pl.BlockSpec((1, N_PAD), resident),
        ]
        if lane_dense:
            # (8, tb//8) block per step: unmasked, contiguous stores; output buffer is tiny.
            out_shape = jax.ShapeDtypeStruct((n_steps * 8, tb // 8), jnp.float32)
            out_spec = pl.BlockSpec((8, tb // 8), lambda i: (i, 0))
        else:
            out_shape = jax.ShapeDtypeStruct((b_pad, 1), jnp.float32)
            out_spec = pl.BlockSpec((tb, 1), lambda i: (i, 0))

        out = pl.pallas_call(
            _deepfm_kernel,
            out_shape=out_shape,
            grid=(n_steps,),
            in_specs=in_specs,
            out_specs=out_spec,
            compiler_params=pltpu.CompilerParams(
                dimension_semantics=("parallel",),
                vmem_limit_bytes=_vmem_limit_bytes(tb),
            ),
        )(x, prep["w_fused"], prep["b_fused"], prep["v"],
          prep["w2p"], prep["b2p"], prep["wfp"])

        if lane_dense:
            return out.reshape(-1)[:batch]          # sigmoid(...).squeeze(-1)
        return out[:batch, 0]

    return forward


_forward_lane_dense = _build_forward(True)
_forward_column = _build_forward(False)
_lane_dense_ok = True   # flipped to False if Mosaic can't lower the (tb,1)->(8,tb//8) relayout


def deepfm_forward(inputs, prep):
    global _lane_dense_ok
    if _lane_dense_ok:
        try:
            return _forward_lane_dense(inputs, prep)
        except Exception:
            _lane_dense_ok = False   # fall back to the previously-validated column output
    return _forward_column(inputs, prep)


# -------------------------- pure-JAX reference (self-check) ----------------
def deepfm_reference(inputs, params):
    """Plain-JAX DeepFM with the same bf16 matmul casts, for numerical comparison."""
    dense = inputs[:, :NUM_DENSE].astype(jnp.float32)
    sparse = inputs[:, NUM_DENSE:].astype(jnp.int32)
    embedded = [jnp.take(params["emb"][i], sparse[:, i], axis=0) for i in range(NUM_SPARSE)]
    x = jnp.concatenate([dense] + embedded, axis=-1)
    xb = x.astype(jnp.bfloat16)
    xq = xb.astype(jnp.float32)

    first = params["fm_w0"] + jnp.dot(xb, params["fm_w1"].astype(jnp.bfloat16),
                                      preferred_element_type=jnp.float32)
    xv = jnp.dot(xb, params["fm_w2"].astype(jnp.bfloat16), preferred_element_type=jnp.float32)
    x2v2 = jnp.sum(xq * xq * jnp.sum(params["fm_w2"] ** 2, axis=1)[None, :],
                   axis=-1, keepdims=True)
    second = 0.5 * (jnp.sum(xv * xv, axis=-1, keepdims=True) - x2v2)

    h = jnp.dot(xb, params["dnn_w1"].astype(jnp.bfloat16),
                preferred_element_type=jnp.float32) + params["dnn_b1"]
    h = jnp.maximum(h, 0.0)
    h = jnp.dot(h.astype(jnp.bfloat16), params["dnn_w2"].astype(jnp.bfloat16),
                preferred_element_type=jnp.float32) + params["dnn_b2"]
    h = jnp.maximum(h, 0.0)
    dnn = jnp.dot(h, params["final_w"]) + params["final_b"]

    return jax.nn.sigmoid(first + second + dnn)[:, 0]


# -------------------------- deterministic param init -----------------------
def init_params(key):
    ks = jax.random.split(key, 16)
    d = INPUTS_DIM
    h1, h2 = HIDDEN_UNITS

    def linear_init(k, fan_in, fan_out):
        bound = 1.0 / jnp.sqrt(fan_in)
        kw, kb = jax.random.split(k)
        w = jax.random.uniform(kw, (fan_in, fan_out), jnp.float32, -bound, bound)
        b = jax.random.uniform(kb, (1, fan_out), jnp.float32, -bound, bound)
        return w, b

    emb_keys = jax.random.split(ks[0], NUM_SPARSE)
    emb = [jax.random.normal(emb_keys[i], (VOCAB_SIZES[i], EMBEDDING_DIM), jnp.float32)
           for i in range(NUM_SPARSE)]

    fm_w0 = jnp.zeros((1, 1), jnp.float32)                     # torch.zeros([1])
    fm_w1 = jax.random.uniform(ks[1], (d, 1), jnp.float32)     # torch.rand
    fm_w2 = jax.random.uniform(ks[2], (d, EMBEDDING_DIM), jnp.float32)

    dnn_w1, dnn_b1 = linear_init(ks[3], d, h1)
    dnn_w2, dnn_b2 = linear_init(ks[4], h1, h2)
    final_w, final_b = linear_init(ks[5], h2, 1)

    return dict(emb=emb, fm_w0=fm_w0, fm_w1=fm_w1, fm_w2=fm_w2,
                dnn_w1=dnn_w1, dnn_b1=dnn_b1,
                dnn_w2=dnn_w2, dnn_b2=dnn_b2,
                final_w=final_w, final_b=final_b)


# ------------------------------- main --------------------------------------
if __name__ == "__main__":
    key = jax.random.PRNGKey(0)
    k_params, k_data = jax.random.split(key)

    params = init_params(k_params)
    prep = prepare_params(params)

    # batch=8   -> single grid step (tb=8, full-dim blocks)
    # batch=1000 -> multi-step grid (tb=504, 2 steps) with padded batch rows
    for batch in (8, 1000):
        kd, ks = jax.random.split(jax.random.fold_in(k_data, batch))
        dense = jax.random.uniform(kd, (batch, NUM_DENSE), jnp.float32)
        sparse_cols = [
            jax.random.randint(jax.random.fold_in(ks, i),
                               (batch, 1), 0, VOCAB_SIZES[i]).astype(jnp.float32)
            for i in range(NUM_SPARSE)
        ]
        inputs = jnp.concatenate([dense] + sparse_cols, axis=-1)    # (B, 13 + 26)

        out = jax.block_until_ready(deepfm_forward(inputs, prep))
        ref = deepfm_reference(inputs, params)

        assert out.shape == (batch,), out.shape
        assert bool(jnp.all(jnp.isfinite(out)))
        assert bool(jnp.all((out >= 0.0) & (out <= 1.0)))
        assert bool(jnp.allclose(out, ref, atol=5e-3, rtol=5e-3)), (batch, out[:8], ref[:8])

    print("KERNEL_OK")
</pallas_src>

<mosaic_0001>
module attributes {stable_mosaic.version = 11 : i64} {
  func.func @_deepfm_kernel(%arg0: i32, %arg1: memref<8x256xbf16, #tpu.memory_space<vmem>>, %arg2: memref<256x128xbf16, #tpu.memory_space<vmem>>, %arg3: memref<1x128xf32, #tpu.memory_space<vmem>>, %arg4: memref<1x256xf32, #tpu.memory_space<vmem>>, %arg5: memref<64x128xbf16, #tpu.memory_space<vmem>>, %arg6: memref<1x128xf32, #tpu.memory_space<vmem>>, %arg7: memref<1x128xf32, #tpu.memory_space<vmem>>, %arg8: memref<8x1xf32, #tpu.memory_space<vmem>>) attributes {dimension_semantics = [#tpu.dimension_semantics<parallel>], iteration_bounds = array<i64: 1>, scalar_prefetch = 0 : i64, scratch_operands = 0 : i64, tpu.core_type = #tpu.core_type<tc>, window_params = [{transform_indices = @transform_0, window_bounds = array<i64: 8, 256>}, {pipeline_mode = #tpu.pipeline_mode<synchronous>, transform_indices = @transform_1, window_bounds = array<i64: 256, 128>}, {pipeline_mode = #tpu.pipeline_mode<synchronous>, transform_indices = @transform_2, window_bounds = array<i64: 1, 128>}, {pipeline_mode = #tpu.pipeline_mode<synchronous>, transform_indices = @transform_3, window_bounds = array<i64: 1, 256>}, {pipeline_mode = #tpu.pipeline_mode<synchronous>, transform_indices = @transform_4, window_bounds = array<i64: 64, 128>}, {pipeline_mode = #tpu.pipeline_mode<synchronous>, transform_indices = @transform_5, window_bounds = array<i64: 1, 128>}, {pipeline_mode = #tpu.pipeline_mode<synchronous>, transform_indices = @transform_6, window_bounds = array<i64: 1, 128>}, {transform_indices = @transform_7, window_bounds = array<i64: 8, 1>}]} {
    %c0 = arith.constant 0 : index
    %c0_0 = arith.constant 0 : index
    %0 = vector.load %arg1[%c0, %c0_0] : memref<8x256xbf16, #tpu.memory_space<vmem>>, vector<8x256xbf16>
    %1 = arith.extf %0 : vector<8x256xbf16> to vector<8x256xf32>
    %c0_1 = arith.constant 0 : index
    %c0_2 = arith.constant 0 : index
    %2 = vector.load %arg2[%c0_1, %c0_2] : memref<256x128xbf16, #tpu.memory_space<vmem>>, vector<256x128xbf16>
    %cst = arith.constant dense<0.000000e+00> : vector<8x128xf32>
    %3 = tpu.matmul %0, %2, %cst {dimension_numbers = #tpu.dot_dimension_numbers<[1], [0], [0], [1], [0, 0, 1, 1], [], []>} : vector<8x256xbf16>, vector<256x128xbf16>, vector<8x128xf32> -> vector<8x128xf32>
    %c0_3 = arith.constant 0 : index
    %c0_4 = arith.constant 0 : index
    %4 = vector.load %arg3[%c0_3, %c0_4] : memref<1x128xf32, #tpu.memory_space<vmem>>, vector<1x128xf32>
    %5 = vector.broadcast %4 : vector<1x128xf32> to vector<8x128xf32>
    %6 = arith.addf %3, %5 : vector<8x128xf32>
    %7 = vector.extract_strided_slice %6 {offsets = [0, 0], sizes = [8, 64], strides = [1, 1]} : vector<8x128xf32> to vector<8x64xf32>
    %cst_5 = arith.constant 0.000000e+00 : f32
    %8 = vector.broadcast %cst_5 : f32 to vector<8x64xf32>
    %9 = arith.maximumf %7, %8 : vector<8x64xf32>
    %10 = vector.extract_strided_slice %6 {offsets = [0, 64], sizes = [8, 8], strides = [1, 1]} : vector<8x128xf32> to vector<8x8xf32>
    %11 = vector.extract_strided_slice %6 {offsets = [0, 72], sizes = [8, 1], strides = [1, 1]} : vector<8x128xf32> to vector<8x1xf32>
    %12 = arith.mulf %1, %1 : vector<8x256xf32>
    %c0_6 = arith.constant 0 : index
    %c0_7 = arith.constant 0 : index
    %13 = vector.load %arg4[%c0_6, %c0_7] : memref<1x256xf32, #tpu.memory_space<vmem>>, vector<1x256xf32>
    %14 = vector.broadcast %13 : vector<1x256xf32> to vector<8x256xf32>
    %15 = arith.mulf %12, %14 : vector<8x256xf32>
    %cst_8 = arith.constant dense<0.000000e+00> : vector<8xf32>
    %16 = vector.multi_reduction <add>, %15, %cst_8 [1] : vector<8x256xf32> to vector<8xf32>
    %17 = vector.shape_cast %16 : vector<8xf32> to vector<8x1xf32>
    %18 = arith.mulf %10, %10 : vector<8x8xf32>
    %cst_9 = arith.constant dense<0.000000e+00> : vector<8xf32>
    %19 = vector.multi_reduction <add>, %18, %cst_9 [1] : vector<8x8xf32> to vector<8xf32>
    %20 = vector.shape_cast %19 : vector<8xf32> to vector<8x1xf32>
    %21 = arith.subf %20, %17 : vector<8x1xf32>
    %cst_10 = arith.constant 5.000000e-01 : f32
    %22 = vector.broadcast %cst_10 : f32 to vector<8x1xf32>
    %23 = arith.mulf %22, %21 : vector<8x1xf32>
    %24 = arith.truncf %9 : vector<8x64xf32> to vector<8x64xbf16>
    %c0_11 = arith.constant 0 : index
    %c0_12 = arith.constant 0 : index
    %25 = vector.load %arg5[%c0_11, %c0_12] : memref<64x128xbf16, #tpu.memory_space<vmem>>, vector<64x128xbf16>
    %cst_13 = arith.constant dense<0.000000e+00> : vector<8x128xf32>
    %26 = tpu.matmul %24, %25, %cst_13 {dimension_numbers = #tpu.dot_dimension_numbers<[1], [0], [0], [1], [0, 0, 1, 1], [], []>} : vector<8x64xbf16>, vector<64x128xbf16>, vector<8x128xf32> -> vector<8x128xf32>
    %c0_14 = arith.constant 0 : index
    %c0_15 = arith.constant 0 : index
    %27 = vector.load %arg6[%c0_14, %c0_15] : memref<1x128xf32, #tpu.memory_space<vmem>>, vector<1x128xf32>
    %28 = vector.broadcast %27 : vector<1x128xf32> to vector<8x128xf32>
    %29 = arith.addf %26, %28 : vector<8x128xf32>
    %cst_16 = arith.constant 0.000000e+00 : f32
    %30 = vector.broadcast %cst_16 : f32 to vector<8x128xf32>
    %31 = arith.maximumf %29, %30 : vector<8x128xf32>
    %c0_17 = arith.constant 0 : index
    %c0_18 = arith.constant 0 : index
    %32 = vector.load %arg7[%c0_17, %c0_18] : memref<1x128xf32, #tpu.memory_space<vmem>>, vector<1x128xf32>
    %33 = vector.broadcast %32 : vector<1x128xf32> to vector<8x128xf32>
    %34 = arith.mulf %31, %33 : vector<8x128xf32>
    %cst_19 = arith.constant dense<0.000000e+00> : vector<8xf32>
    %35 = vector.multi_reduction <add>, %34, %cst_19 [1] : vector<8x128xf32> to vector<8xf32>
    %36 = vector.shape_cast %35 : vector<8xf32> to vector<8x1xf32>
    %37 = arith.addf %11, %23 : vector<8x1xf32>
    %38 = arith.addf %37, %36 : vector<8x1xf32>
    %39 = arith.negf %38 : vector<8x1xf32>
    %40 = math.exp %39 : vector<8x1xf32>
    %cst_20 = arith.constant 1.000000e+00 : f32
    %41 = vector.broadcast %cst_20 : f32 to vector<8x1xf32>
    %42 = arith.addf %41, %40 : vector<8x1xf32>
    %43 = arith.divf %41, %42 : vector<8x1xf32>
    %c0_21 = arith.constant 0 : index
    %c0_22 = arith.constant 0 : index
    %44 = vector.load %arg8[%c0_21, %c0_22] : memref<8x1xf32, #tpu.memory_space<vmem>>, vector<8x1xf32>
    tpu.vector_store %arg8[%c0_21, %c0_22], %43 {strides = array<i32>} : memref<8x1xf32, #tpu.memory_space<vmem>>, vector<8x1xf32>,
    return
  }
  func.func @transform_0(%arg0: i32) -> (i32, i32) {
    %c0_i32 = arith.constant 0 : i32
    %c0_i32_0 = arith.constant 0 : i32
    return %arg0, %c0_i32 : i32, i32
  }
  func.func @transform_1(%arg0: i32) -> (i32, i32) {
    %c0_i32 = arith.constant 0 : i32
    %c0_i32_0 = arith.constant 0 : i32
    %c0_i32_1 = arith.constant 0 : i32
    return %c0_i32, %c0_i32_0 : i32, i32
  }
  func.func @transform_2(%arg0: i32) -> (i32, i32) {
    %c0_i32 = arith.constant 0 : i32
    %c0_i32_0 = arith.constant 0 : i32
    %c0_i32_1 = arith.constant 0 : i32
    return %c0_i32, %c0_i32_0 : i32, i32
  }
  func.func @transform_3(%arg0: i32) -> (i32, i32) {
    %c0_i32 = arith.constant 0 : i32
    %c0_i32_0 = arith.constant 0 : i32
    %c0_i32_1 = arith.constant 0 : i32
    return %c0_i32, %c0_i32_0 : i32, i32
  }
  func.func @transform_4(%arg0: i32) -> (i32, i32) {
    %c0_i32 = arith.constant 0 : i32
    %c0_i32_0 = arith.constant 0 : i32
    %c0_i32_1 = arith.constant 0 : i32
    return %c0_i32, %c0_i32_0 : i32, i32
  }
  func.func @transform_5(%arg0: i32) -> (i32, i32) {
    %c0_i32 = arith.constant 0 : i32
    %c0_i32_0 = arith.constant 0 : i32
    %c0_i32_1 = arith.constant 0 : i32
    return %c0_i32, %c0_i32_0 : i32, i32
  }
  func.func @transform_6(%arg0: i32) -> (i32, i32) {
    %c0_i32 = arith.constant 0 : i32
    %c0_i32_0 = arith.constant 0 : i32
    %c0_i32_1 = arith.constant 0 : i32
    return %c0_i32, %c0_i32_0 : i32, i32
  }
  func.func @transform_7(%arg0: i32) -> (i32, i32) {
    %c0_i32 = arith.constant 0 : i32
    %c0_i32_0 = arith.constant 0 : i32
    return %arg0, %c0_i32 : i32, i32
  }
}

module attributes {stable_mosaic.version = 11 : i64} {
  func.func @_deepfm_kernel(%arg0: i32, %arg1: memref<8x256xbf16, #tpu.memory_space<vmem>>, %arg2: memref<256x128xbf16, #tpu.memory_space<vmem>>, %arg3: memref<1x128xf32, #tpu.memory_space<vmem>>, %arg4: memref<1x256xf32, #tpu.memory_space<vmem>>, %arg5: memref<64x128xbf16, #tpu.memory_space<vmem>>, %arg6: memref<1x128xf32, #tpu.memory_space<vmem>>, %arg7: memref<1x128xf32, #tpu.memory_space<vmem>>, %arg8: memref<8x1xf32, #tpu.memory_space<vmem>>) attributes {dimension_semantics = [#tpu.dimension_semantics<parallel>], iteration_bounds = array<i64: 1>, scalar_prefetch = 0 : i64, scratch_operands = 0 : i64, tpu.core_type = #tpu.core_type<tc>, window_params = [{transform_indices = @transform_0, window_bounds = array<i64: 8, 256>}, {pipeline_mode = #tpu.pipeline_mode<synchronous>, transform_indices = @transform_1, window_bounds = array<i64: 256, 128>}, {pipeline_mode = #tpu.pipeline_mode<synchronous>, transform_indices = @transform_2, window_bounds = array<i64: 1, 128>}, {pipeline_mode = #tpu.pipeline_mode<synchronous>, transform_indices = @transform_3, window_bounds = array<i64: 1, 256>}, {pipeline_mode = #tpu.pipeline_mode<synchronous>, transform_indices = @transform_4, window_bounds = array<i64: 64, 128>}, {pipeline_mode = #tpu.pipeline_mode<synchronous>, transform_indices = @transform_5, window_bounds = array<i64: 1, 128>}, {pipeline_mode = #tpu.pipeline_mode<synchronous>, transform_indices = @transform_6, window_bounds = array<i64: 1, 128>}, {transform_indices = @transform_7, window_bounds = array<i64: 8, 1>}]} {
    %c0 = arith.constant 0 : index
    %c0_0 = arith.constant 0 : index
    %0 = vector.load %arg1[%c0, %c0_0] : memref<8x256xbf16, #tpu.memory_space<vmem>>, vector<8x256xbf16>
    %1 = arith.extf %0 : vector<8x256xbf16> to vector<8x256xf32>
    %c0_1 = arith.constant 0 : index
    %c0_2 = arith.constant 0 : index
    %2 = vector.load %arg2[%c0_1, %c0_2] : memref<256x128xbf16, #tpu.memory_space<vmem>>, vector<256x128xbf16>
    %cst = arith.constant dense<0.000000e+00> : vector<8x128xf32>
    %3 = tpu.matmul %0, %2, %cst {dimension_numbers = #tpu.dot_dimension_numbers<[1], [0], [0], [1], [0, 0, 1, 1], [], []>} : vector<8x256xbf16>, vector<256x128xbf16>, vector<8x128xf32> -> vector<8x128xf32>
    %c0_3 = arith.constant 0 : index
    %c0_4 = arith.constant 0 : index
    %4 = vector.load %arg3[%c0_3, %c0_4] : memref<1x128xf32, #tpu.memory_space<vmem>>, vector<1x128xf32>
    %5 = vector.broadcast %4 : vector<1x128xf32> to vector<8x128xf32>
    %6 = arith.addf %3, %5 : vector<8x128xf32>
    %7 = vector.extract_strided_slice %6 {offsets = [0, 0], sizes = [8, 64], strides = [1, 1]} : vector<8x128xf32> to vector<8x64xf32>
    %cst_5 = arith.constant 0.000000e+00 : f32
    %8 = vector.broadcast %cst_5 : f32 to vector<8x64xf32>
    %9 = arith.maximumf %7, %8 : vector<8x64xf32>
    %10 = vector.extract_strided_slice %6 {offsets = [0, 64], sizes = [8, 8], strides = [1, 1]} : vector<8x128xf32> to vector<8x8xf32>
    %11 = vector.extract_strided_slice %6 {offsets = [0, 72], sizes = [8, 1], strides = [1, 1]} : vector<8x128xf32> to vector<8x1xf32>
    %12 = arith.mulf %1, %1 : vector<8x256xf32>
    %c0_6 = arith.constant 0 : index
    %c0_7 = arith.constant 0 : index
    %13 = vector.load %arg4[%c0_6, %c0_7] : memref<1x256xf32, #tpu.memory_space<vmem>>, vector<1x256xf32>
    %14 = vector.broadcast %13 : vector<1x256xf32> to vector<8x256xf32>
    %15 = arith.mulf %12, %14 : vector<8x256xf32>
    %cst_8 = arith.constant dense<0.000000e+00> : vector<8xf32>
    %16 = vector.multi_reduction <add>, %15, %cst_8 [1] : vector<8x256xf32> to vector<8xf32>
    %17 = vector.shape_cast %16 : vector<8xf32> to vector<8x1xf32>
    %18 = arith.mulf %10, %10 : vector<8x8xf32>
    %cst_9 = arith.constant dense<0.000000e+00> : vector<8xf32>
    %19 = vector.multi_reduction <add>, %18, %cst_9 [1] : vector<8x8xf32> to vector<8xf32>
    %20 = vector.shape_cast %19 : vector<8xf32> to vector<8x1xf32>
    %21 = arith.subf %20, %17 : vector<8x1xf32>
    %cst_10 = arith.constant 5.000000e-01 : f32
    %22 = vector.broadcast %cst_10 : f32 to vector<8x1xf32>
    %23 = arith.mulf %22, %21 : vector<8x1xf32>
    %24 = arith.truncf %9 : vector<8x64xf32> to vector<8x64xbf16>
    %c0_11 = arith.constant 0 : index
    %c0_12 = arith.constant 0 : index
    %25 = vector.load %arg5[%c0_11, %c0_12] : memref<64x128xbf16, #tpu.memory_space<vmem>>, vector<64x128xbf16>
    %cst_13 = arith.constant dense<0.000000e+00> : vector<8x128xf32>
    %26 = tpu.matmul %24, %25, %cst_13 {dimension_numbers = #tpu.dot_dimension_numbers<[1], [0], [0], [1], [0, 0, 1, 1], [], []>} : vector<8x64xbf16>, vector<64x128xbf16>, vector<8x128xf32> -> vector<8x128xf32>
    %c0_14 = arith.constant 0 : index
    %c0_15 = arith.constant 0 : index
    %27 = vector.load %arg6[%c0_14, %c0_15] : memref<1x128xf32, #tpu.memory_space<vmem>>, vector<1x128xf32>
    %28 = vector.broadcast %27 : vector<1x128xf32> to vector<8x128xf32>
    %29 = arith.addf %26, %28 : vector<8x128xf32>
    %cst_16 = arith.constant 0.000000e+00 : f32
    %30 = vector.broadcast %cst_16 : f32 to vector<8x128xf32>
    %31 = arith.maximumf %29, %30 : vector<8x128xf32>
    %c0_17 = arith.constant 0 : index
    %c0_18 = arith.constant 0 : index
    %32 = vector.load %arg7[%c0_17, %c0_18] : memref<1x128xf32, #tpu.memory_space<vmem>>, vector<1x128xf32>
    %33 = vector.broadcast %32 : vector<1x128xf32> to vector<8x128xf32>
    %34 = arith.mulf %31, %33 : vector<8x128xf32>
    %cst_19 = arith.constant dense<0.000000e+00> : vector<8xf32>
    %35 = vector.multi_reduction <add>, %34, %cst_19 [1] : vector<8x128xf32> to vector<8xf32>
    %36 = vector.shape_cast %35 : vector<8xf32> to vector<8x1xf32>
    %37 = arith.addf %11, %23 : vector<8x1xf32>
    %38 = arith.addf %37, %36 : vector<8x1xf32>
    %39 = arith.negf %38 : vector<8x1xf32>
    %40 = math.exp %39 : vector<8x1xf32>
    %cst_20 = arith.constant 1.000000e+00 : f32
    %41 = vector.broadcast %cst_20 : f32 to vector<8x1xf32>
    %42 = arith.addf %41, %40 : vector<8x1xf32>
    %43 = arith.divf %41, %42 : vector<8x1xf32>
    %c0_21 = arith.constant 0 : index
    %c0_22 = arith.constant 0 : index
    %44 = vector.load %arg8[%c0_21, %c0_22] : memref<8x1xf32, #tpu.memory_space<vmem>>, vector<8x1xf32>
    tpu.vector_store %arg8[%c0_21, %c0_22], %43 {strides = array<i32>} : memref<8x1xf32, #tpu.memory_space<vmem>>, vector<8x1xf32>,
    return
  }
  func.func @transform_0(%arg0: i32) -> (i32, i32) {
    %c0_i32 = arith.constant 0 : i32
    %c0_i32_0 = arith.constant 0 : i32
    return %arg0, %c0_i32 : i32, i32
  }
  func.func @transform_1(%arg0: i32) -> (i32, i32) {
    %c0_i32 = arith.constant 0 : i32
    %c0_i32_0 = arith.constant 0 : i32
    %c0_i32_1 = arith.constant 0 : i32
    return %c0_i32, %c0_i32_0 : i32, i32
  }
  func.func @transform_2(%arg0: i32) -> (i32, i32) {
    %c0_i32 = arith.constant 0 : i32
    %c0_i32_0 = arith.constant 0 : i32
    %c0_i32_1 = arith.constant 0 : i32
    return %c0_i32, %c0_i32_0 : i32, i32
  }
  func.func @transform_3(%arg0: i32) -> (i32, i32) {
    %c0_i32 = arith.constant 0 : i32
    %c0_i32_0 = arith.constant 0 : i32
    %c0_i32_1 = arith.constant 0 : i32
    return %c0_i32, %c0_i32_0 : i32, i32
  }
  func.func @transform_4(%arg0: i32) -> (i32, i32) {
    %c0_i32 = arith.constant 0 : i32
    %c0_i32_0 = arith.constant 0 : i32
    %c0_i32_1 = arith.constant 0 : i32
    return %c0_i32, %c0_i32_0 : i32, i32
  }
  func.func @transform_5(%arg0: i32) -> (i32, i32) {
    %c0_i32 = arith.constant 0 : i32
    %c0_i32_0 = arith.constant 0 : i32
    %c0_i32_1 = arith.constant 0 : i32
    return %c0_i32, %c0_i32_0 : i32, i32
  }
  func.func @transform_6(%arg0: i32) -> (i32, i32) {
    %c0_i32 = arith.constant 0 : i32
    %c0_i32_0 = arith.constant 0 : i32
    %c0_i32_1 = arith.constant 0 : i32
    return %c0_i32, %c0_i32_0 : i32, i32
  }
  func.func @transform_7(%arg0: i32) -> (i32, i32) {
    %c0_i32 = arith.constant 0 : i32
    %c0_i32_0 = arith.constant 0 : i32
    return %arg0, %c0_i32 : i32, i32
  }
}

</mosaic_0001>

<llo_original>
// kernel: forward.1
$region0: #{forward.1}
  #allocation0 [shape = 'u32[]', space=smem, size = 0x4, offset = 0x4, fixed_abs, tag = 'smem constant byte address 0x4 - core index']
  #allocation1 [shape = 'u32[144,128]{1,0:T(1,128)}', space=vmem, size = 0x12000, scoped, tag = 'internal scratch']
  %s0 = inlined_call_operand.vmem [shape: bf16[8,256], index: 0, kind: input, shape index: {}]
  %s1 = inlined_call_operand.vmem [shape: bf16[256,128], index: 1, kind: input, shape index: {}]
  %s2 = inlined_call_operand.vmem [shape: f32[1,128], index: 2, kind: input, shape index: {}]
  %s3 = inlined_call_operand.vmem [shape: f32[1,256], index: 3, kind: input, shape index: {}]
  %s4 = inlined_call_operand.vmem [shape: bf16[64,128], index: 4, kind: input, shape index: {}]
  %s5 = inlined_call_operand.vmem [shape: f32[1,128], index: 5, kind: input, shape index: {}]
  %s6 = inlined_call_operand.vmem [shape: f32[1,128], index: 6, kind: input, shape index: {}]
  %s7 = inlined_call_operand.vmem [shape: f32[8,1], index: 7, kind: output, shape index: {}]
  %s8 = sld [smem:[#allocation0]]
  $region38: #{forward.1} parent=0
    _
  %s10 = ssub.s32 1, %s8
  %s11 = scalar_select 0, %s10, %s8
  // Predicated region
  $region2: #{forward.1} parent=0 // pred_check
    _
  $region3: #{forward.1} parent=0 // pred_check_branch
    %13 = sbr.rel (0) target = $region5
  $region4: #{forward.1} parent=0 // pred_region
    _
  $region5: #{forward.1} parent=0 // pred_fallthru
    _
  // Predicated region
  $region6: #{forward.1} parent=0 // pred_check
    _
  $region7: #{forward.1} parent=0 // pred_check_branch
    %15 = sbr.rel (0) target = $region9
  $region8: #{forward.1} parent=0 // pred_region
    _
  $region9: #{forward.1} parent=0 // pred_fallthru
    _
  // Predicated region
  $region10: #{forward.1} parent=0 // pred_check
    _
  $region11: #{forward.1} parent=0 // pred_check_branch
    %17 = sbr.rel (0) target = $region13
  $region12: #{forward.1} parent=0 // pred_region
    _
  $region13: #{forward.1} parent=0 // pred_fallthru
    _
  // Predicated region
  $region14: #{forward.1} parent=0 // pred_check
    _
  $region15: #{forward.1} parent=0 // pred_check_branch
    %19 = sbr.rel (0) target = $region17
  $region16: #{forward.1} parent=0 // pred_region
    _
  $region17: #{forward.1} parent=0 // pred_fallthru
    _
  // Predicated region
  $region18: #{forward.1} parent=0 // pred_check
    _
  $region19: #{forward.1} parent=0 // pred_check_branch
    %21 = sbr.rel (0) target = $region21
  $region20: #{forward.1} parent=0 // pred_region
    _
  $region21: #{forward.1} parent=0 // pred_fallthru
    _
  // Predicated region
  $region22: #{forward.1} parent=0 // pred_check
    _
  $region23: #{forward.1} parent=0 // pred_check_branch
    %23 = sbr.rel (0) target = $region25
  $region24: #{forward.1} parent=0 // pred_region
    _
  $region25: #{forward.1} parent=0 // pred_fallthru
    _
  // Predicated region
  $region26: #{forward.1} parent=0 // pred_check
    _
  $region27: #{forward.1} parent=0 // pred_check_branch
    %25 = sbr.rel (0) target = $region29
  $region28: #{forward.1} parent=0 // pred_region
    _
  $region29: #{forward.1} parent=0 // pred_fallthru
    _
  %v27 = vld [vmem:[%s0] sm:$0xff]
  %v28 = vunpack.c.l.bf16 %v27
  %v29 = vunpack.c.h.bf16 %v27
  %v30 = vld [vmem:[%s1] sm:$0xf]
  %v31 = vld [vmem:[%s1 + $0x4] sm:$0xf]
  %v32 = vld [vmem:[%s1 + $0x8] sm:$0xf]
  %v33 = vld [vmem:[%s1 + $0xc] sm:$0xf]
  %v34 = vld [vmem:[%s1 + $0x10] sm:$0xf]
  %v35 = vld [vmem:[%s1 + $0x14] sm:$0xf]
  %v36 = vld [vmem:[%s1 + $0x18] sm:$0xf]
  %v37 = vld [vmem:[%s1 + $0x1c] sm:$0xf]
  %v38 = vld [vmem:[%s1 + $0x20] sm:$0xf]
  %v39 = vld [vmem:[%s1 + $0x24] sm:$0xf]
  %v40 = vld [vmem:[%s1 + $0x28] sm:$0xf]
  %v41 = vld [vmem:[%s1 + $0x2c] sm:$0xf]
  %v42 = vld [vmem:[%s1 + $0x30] sm:$0xf]
  %v43 = vld [vmem:[%s1 + $0x34] sm:$0xf]
  %v44 = vld [vmem:[%s1 + $0x38] sm:$0xf]
  %v45 = vld [vmem:[%s1 + $0x3c] sm:$0xf]
  %v46 = vld [vmem:[%s1 + $0x40] sm:$0xf]
  %v47 = vld [vmem:[%s1 + $0x44] sm:$0xf]
  %v48 = vld [vmem:[%s1 + $0x48] sm:$0xf]
  %v49 = vld [vmem:[%s1 + $0x4c] sm:$0xf]
  %v50 = vld [vmem:[%s1 + $0x50] sm:$0xf]
  %v51 = vld [vmem:[%s1 + $0x54] sm:$0xf]
  %v52 = vld [vmem:[%s1 + $0x58] sm:$0xf]
  %v53 = vld [vmem:[%s1 + $0x5c] sm:$0xf]
  %v54 = vld [vmem:[%s1 + $0x60] sm:$0xf]
  %v55 = vld [vmem:[%s1 + $0x64] sm:$0xf]
  %v56 = vld [vmem:[%s1 + $0x68] sm:$0xf]
  %v57 = vld [vmem:[%s1 + $0x6c] sm:$0xf]
  %v58 = vld [vmem:[%s1 + $0x70] sm:$0xf]
  %v59 = vld [vmem:[%s1 + $0x74] sm:$0xf]
  %v60 = vld [vmem:[%s1 + $0x78] sm:$0xf]
  %v61 = vld [vmem:[%s1 + $0x7c] sm:$0xf]
  %v62 = vld [vmem:[%s2] sm:$0x1]
  %v64 = vlaneseq
  %v65 = vshrl.u32 %v64, 7
  %v66 = vsub.s32 0, %v65
  %v67 = vrot.slane %v62, %v66
  %v70 = vunpack.c.l.b16 %v27
  %v71 = vunpack.c.h.b16 %v27
  %v72 = vpack.c.b16 %v70, %v70
  %v73 = vpack.c.b16 %v71, %v71
  %v108 = vunpack.c.l.b16 %v30
  %v109 = vunpack.c.l.b16 %v31
  %v110 = vunpack.c.l.b16 %v32
  %v111 = vunpack.c.l.b16 %v33
  %v112 = vunpack.c.l.b16 %v34
  %v113 = vunpack.c.l.b16 %v35
  %v114 = vunpack.c.l.b16 %v36
  %v115 = vunpack.c.l.b16 %v37
  %v116 = vunpack.c.l.b16 %v38
  %v117 = vunpack.c.l.b16 %v39
  %v118 = vunpack.c.l.b16 %v40
  %v119 = vunpack.c.l.b16 %v41
  %v120 = vunpack.c.l.b16 %v42
  %v121 = vunpack.c.l.b16 %v43
  %v122 = vunpack.c.l.b16 %v44
  %v123 = vunpack.c.l.b16 %v45
  %v124 = vunpack.c.l.b16 %v46
  %v125 = vunpack.c.l.b16 %v47
  %v126 = vunpack.c.l.b16 %v48
  %v127 = vunpack.c.l.b16 %v49
  %v128 = vunpack.c.l.b16 %v50
  %v129 = vunpack.c.l.b16 %v51
  %v130 = vunpack.c.l.b16 %v52
  %v131 = vunpack.c.l.b16 %v53
  %v132 = vunpack.c.l.b16 %v54
  %v133 = vunpack.c.l.b16 %v55
  %v134 = vunpack.c.l.b16 %v56
  %v135 = vunpack.c.l.b16 %v57
  %v136 = vunpack.c.l.b16 %v58
  %v137 = vunpack.c.l.b16 %v59
  %v138 = vunpack.c.l.b16 %v60
  %v139 = vunpack.c.l.b16 %v61
  %v140 = vpack.c.b16 %v109, %v108
  %v141 = vpack.c.b16 %v111, %v110
  %v142 = vpack.c.b16 %v113, %v112
  %v143 = vpack.c.b16 %v115, %v114
  %v144 = vpack.c.b16 %v117, %v116
  %v145 = vpack.c.b16 %v119, %v118
  %v146 = vpack.c.b16 %v121, %v120
  %v147 = vpack.c.b16 %v123, %v122
  %v148 = vpack.c.b16 %v125, %v124
  %v149 = vpack.c.b16 %v127, %v126
  %v150 = vpack.c.b16 %v129, %v128
  %v151 = vpack.c.b16 %v131, %v130
  %v152 = vpack.c.b16 %v133, %v132
  %v153 = vpack.c.b16 %v135, %v134
  %v154 = vpack.c.b16 %v137, %v136
  %v155 = vpack.c.b16 %v139, %v138
  %172 = vmatprep.subr.bf16.mxu0 0
  %173 = vmatpush1.bf16.msra.mxu0 %v147
  %174 = vmatprep.subr.bf16.mxu0 0
  %175 = vmatpush1.bf16.msra.mxu0 %v146
  %176 = vmatprep.subr.bf16.mxu0 0
  %177 = vmatpush1.bf16.msra.mxu0 %v145
  %178 = vmatprep.subr.bf16.mxu0 0
  %179 = vmatpush1.bf16.msra.mxu0 %v144
  %180 = vmatprep.subr.bf16.mxu0 0
  %181 = vmatpush1.bf16.msra.mxu0 %v143
  %182 = vmatprep.subr.bf16.mxu0 0
  %183 = vmatpush1.bf16.msra.mxu0 %v142
  %184 = vmatprep.subr.bf16.mxu0 0
  %185 = vmatpush1.bf16.msra.mxu0 %v141
  %186 = vmatprep.subr.bf16.mxu0 0
  %187 = vmatpush1.bf16.msra.mxu0 %v140
  %188 = vmatprep.subr.bf16.mxu0 0
  %189 = vmatpush2.bf16.msra.mxu0 %v155
  %190 = vmatprep.subr.bf16.mxu0 0
  %191 = vmatpush2.bf16.msra.mxu0 %v154
  %192 = vmatprep.subr.bf16.mxu0 0
  %193 = vmatpush2.bf16.msra.mxu0 %v153
  %194 = vmatprep.subr.bf16.mxu0 0
  %195 = vmatpush2.bf16.msra.mxu0 %v152
  %196 = vmatprep.subr.bf16.mxu0 0
  %197 = vmatpush2.bf16.msra.mxu0 %v151
  %198 = vmatprep.subr.bf16.mxu0 0
  %199 = vmatpush2.bf16.msra.mxu0 %v150
  %200 = vmatprep.subr.bf16.mxu0 0
  %201 = vmatpush2.bf16.msra.mxu0 %v149
  %202 = vmatprep.subr.bf16.mxu0 0
  %203 = vmatpush2.bf16.msra.mxu0 %v148
  %204 = vmatprep.mubr.bf16.mxu0 %v73
  %205 = vmatmul.mubr.bf16.gmra.mxu0 %v72
  %v206 = vpop.f32.mrf.mxu0
  %v207 = vadd.f32 %v67, %v206
  %v208 = vpop.f32.mrf.mxu0
  %v209 = vpop.f32.mrf.mxu0
  %v210 = vpop.f32.mrf.mxu0
  %211 = vdwg.mxu0
  %v212 = vmax.f32 %v207, 0.0
  %v213 = vmul.f32 %v28, %v28
  %v214 = vmul.f32 %v29, %v29
  %v215 = vld [vmem:[%s3] sm:$0x3]
  %v217 = vlaneseq
  %v218 = vshrl.u32 %v217, 7
  %v219 = vsub.s32 0, %v218
  %v220 = vrot.slane %v215, %v219
  %v221 = vlaneseq
  %v222 = vshrl.u32 %v221, 7
  %v223 = vsub.s32 1, %v222
  %v224 = vrot.slane %v215, %v223
  %v227 = vmul.f32 %v213, %v220
  %v228 = vmul.f32 %v214, %v224
  %v229 = vadd.f32 %v227, %v228
  %230 = vadd.xlane.f32.xlu0 %v229
  %v231 = vpop.xlane.xlu0 %230
  %v232 = vmul.f32 %v207, %v207
  %234 = vrot.lane.b32.xlu0 %v232, 64
  %v235 = vpop.permute.xlu0 %234
  %vm237 = vcmask 64512
  %v238 = vsel %vm237, %v235, 0.0
  %239 = vadd.xlane.f32.xlu0 %v238
  %v240 = vpop.xlane.xlu0 %239
  %v241 = vsub.f32 %v240, %v231
  %v242 = vmul.f32 %v241, 0.5
  %v243 = vpack.c.bf16 %v212, %v212
  %v244 = vld [vmem:[%s4] sm:$0xf]
  %v245 = vld [vmem:[%s4 + $0x4] sm:$0xf]
  %v246 = vld [vmem:[%s4 + $0x8] sm:$0xf]
  %v247 = vld [vmem:[%s4 + $0xc] sm:$0xf]
  %v248 = vld [vmem:[%s4 + $0x10] sm:$0xf]
  %v249 = vld [vmem:[%s4 + $0x14] sm:$0xf]
  %v250 = vld [vmem:[%s4 + $0x18] sm:$0xf]
  %v251 = vld [vmem:[%s4 + $0x1c] sm:$0xf]
  %v252 = vld [vmem:[%s5] sm:$0x1]
  %v254 = vlaneseq
  %v255 = vshrl.u32 %v254, 7
  %v256 = vsub.s32 0, %v255
  %v257 = vrot.slane %v252, %v256
  %v267 = vunpack.c.l.b16 %v244
  %v268 = vunpack.c.l.b16 %v245
  %v269 = vunpack.c.l.b16 %v246
  %v270 = vunpack.c.l.b16 %v247
  %v271 = vunpack.c.l.b16 %v248
  %v272 = vunpack.c.l.b16 %v249
  %v273 = vunpack.c.l.b16 %v250
  %v274 = vunpack.c.l.b16 %v251
  %v275 = vpack.c.b16 %v268, %v267
  %v276 = vpack.c.b16 %v270, %v269
  %v277 = vpack.c.b16 %v272, %v271
  %v278 = vpack.c.b16 %v274, %v273
  %vm283 = vcmask 523264
  %v285 = vsel %vm283, %v243, 0
  %287 = vmatprep.subr.bf16.mxu0 0
  %288 = vmatpush1.bf16.msra.mxu0 0
  %289 = vmatprep.subr.bf16.mxu0 0
  %290 = vmatpush1.bf16.msra.mxu0 0
  %291 = vmatprep.subr.bf16.mxu0 0
  %292 = vmatpush1.bf16.msra.mxu0 0
  %293 = vmatprep.subr.bf16.mxu0 0
  %294 = vmatpush1.bf16.msra.mxu0 0
  %295 = vmatprep.subr.bf16.mxu0 0
  %296 = vmatpush1.bf16.msra.mxu0 %v278
  %297 = vmatprep.subr.bf16.mxu0 0
  %298 = vmatpush1.bf16.msra.mxu0 %v277
  %299 = vmatprep.subr.bf16.mxu0 0
  %300 = vmatpush1.bf16.msra.mxu0 %v276
  %301 = vmatprep.subr.bf16.mxu0 0
  %302 = vmatpush1.bf16.msra.mxu0 %v275
  %303 = vmatprep.subr.bf16.mxu0 0
  %304 = vmatpush2.bf16.msra.mxu0 0
  %305 = vmatprep.subr.bf16.mxu0 0
  %306 = vmatpush2.bf16.msra.mxu0 0
  %307 = vmatprep.subr.bf16.mxu0 0
  %308 = vmatpush2.bf16.msra.mxu0 0
  %309 = vmatprep.subr.bf16.mxu0 0
  %310 = vmatpush2.bf16.msra.mxu0 0
  %311 = vmatprep.subr.bf16.mxu0 0
  %312 = vmatpush2.bf16.msra.mxu0 0
  %313 = vmatprep.subr.bf16.mxu0 0
  %314 = vmatpush2.bf16.msra.mxu0 0
  %315 = vmatprep.subr.bf16.mxu0 0
  %316 = vmatpush2.bf16.msra.mxu0 0
  %317 = vmatprep.subr.bf16.mxu0 0
  %318 = vmatpush2.bf16.msra.mxu0 0
  %319 = vmatprep.mubr.bf16.mxu0 0
  %320 = vmatmul.mubr.bf16.gmra.mxu0 %v285
  %v321 = vpop.f32.mrf.mxu0
  %v322 = vadd.f32 %v257, %v321
  %v323 = vpop.f32.mrf.mxu0
  %v324 = vpop.f32.mrf.mxu0
  %v325 = vpop.f32.mrf.mxu0
  %326 = vdwg.mxu0
  %v327 = vmax.f32 %v322, 0.0
  %v328 = vld [vmem:[%s6] sm:$0x1]
  %v330 = vlaneseq
  %v331 = vshrl.u32 %v330, 7
  %v332 = vsub.s32 0, %v331
  %v333 = vrot.slane %v328, %v332
  %v335 = vmul.f32 %v327, %v333
  %336 = vadd.xlane.f32.xlu0 %v335
  %v337 = vpop.xlane.xlu0 %336
  %v338 = vadd.f32 %v207, %v242
  %v339 = vadd.f32 %v338, %v337
  %v340 = vxor.u32 %v339, 2147483648
  %v341 = vmul.f32 %v340, 1.442695
  %v342 = vpow.pop %v341
  %v343 = vadd.f32 %v342, 1.0
  %v344 = vrcp.pop %v343
  %v345 = vmul.f32 1.0, %v344
  %347 = vrot.lane.b32.xlu0 %v345, 56
  %v348 = vpop.permute.xlu0 %347
  %vm350 = vcmask 7168
  %351 = vst.msk [vmem:[%s7] sm:$0xff] %vm350, %v348
  // Predicated region
  $region30: #{forward.1} parent=0 // pred_check
    _
  $region31: #{forward.1} parent=0 // pred_check_branch
    %353 = sbr.rel (0) target = $region33
  $region32: #{forward.1} parent=0 // pred_region
    _
  $region33: #{forward.1} parent=0 // pred_fallthru
    _
  // Predicated region
  $region34: #{forward.1} parent=0 // pred_check
    _
  $region35: #{forward.1} parent=0 // pred_check_branch
    %355 = sbr.rel (0) target = $region37
  $region36: #{forward.1} parent=0 // pred_region
    _
  $region37: #{forward.1} parent=0 // pred_fallthru
    _

// kernel: forward.1
$region0: #{forward.1}
  #allocation0 [shape = 'u32[]', space=smem, size = 0x4, offset = 0x4, fixed_abs, tag = 'smem constant byte address 0x4 - core index']
  #allocation1 [shape = 'u32[144,128]{1,0:T(1,128)}', space=vmem, size = 0x12000, scoped, tag = 'internal scratch']
  %s0 = inlined_call_operand.vmem [shape: bf16[8,256], index: 0, kind: input, shape index: {}]
  %s1 = inlined_call_operand.vmem [shape: bf16[256,128], index: 1, kind: input, shape index: {}]
  %s2 = inlined_call_operand.vmem [shape: f32[1,128], index: 2, kind: input, shape index: {}]
  %s3 = inlined_call_operand.vmem [shape: f32[1,256], index: 3, kind: input, shape index: {}]
  %s4 = inlined_call_operand.vmem [shape: bf16[64,128], index: 4, kind: input, shape index: {}]
  %s5 = inlined_call_operand.vmem [shape: f32[1,128], index: 5, kind: input, shape index: {}]
  %s6 = inlined_call_operand.vmem [shape: f32[1,128], index: 6, kind: input, shape index: {}]
  %s7 = inlined_call_operand.vmem [shape: f32[8,1], index: 7, kind: output, shape index: {}]
  %s8 = sld [smem:[#allocation0]]
  $region38: #{forward.1} parent=0
    _
  %s10 = ssub.s32 1, %s8
  %s11 = scalar_select 0, %s10, %s8
  // Predicated region
  $region2: #{forward.1} parent=0 // pred_check
    _
  $region3: #{forward.1} parent=0 // pred_check_branch
    %13 = sbr.rel (0) target = $region5
  $region4: #{forward.1} parent=0 // pred_region
    _
  $region5: #{forward.1} parent=0 // pred_fallthru
    _
  // Predicated region
  $region6: #{forward.1} parent=0 // pred_check
    _
  $region7: #{forward.1} parent=0 // pred_check_branch
    %15 = sbr.rel (0) target = $region9
  $region8: #{forward.1} parent=0 // pred_region
    _
  $region9: #{forward.1} parent=0 // pred_fallthru
    _
  // Predicated region
  $region10: #{forward.1} parent=0 // pred_check
    _
  $region11: #{forward.1} parent=0 // pred_check_branch
    %17 = sbr.rel (0) target = $region13
  $region12: #{forward.1} parent=0 // pred_region
    _
  $region13: #{forward.1} parent=0 // pred_fallthru
    _
  // Predicated region
  $region14: #{forward.1} parent=0 // pred_check
    _
  $region15: #{forward.1} parent=0 // pred_check_branch
    %19 = sbr.rel (0) target = $region17
  $region16: #{forward.1} parent=0 // pred_region
    _
  $region17: #{forward.1} parent=0 // pred_fallthru
    _
  // Predicated region
  $region18: #{forward.1} parent=0 // pred_check
    _
  $region19: #{forward.1} parent=0 // pred_check_branch
    %21 = sbr.rel (0) target = $region21
  $region20: #{forward.1} parent=0 // pred_region
    _
  $region21: #{forward.1} parent=0 // pred_fallthru
    _
  // Predicated region
  $region22: #{forward.1} parent=0 // pred_check
    _
  $region23: #{forward.1} parent=0 // pred_check_branch
    %23 = sbr.rel (0) target = $region25
  $region24: #{forward.1} parent=0 // pred_region
    _
  $region25: #{forward.1} parent=0 // pred_fallthru
    _
  // Predicated region
  $region26: #{forward.1} parent=0 // pred_check
    _
  $region27: #{forward.1} parent=0 // pred_check_branch
    %25 = sbr.rel (0) target = $region29
  $region28: #{forward.1} parent=0 // pred_region
    _
  $region29: #{forward.1} parent=0 // pred_fallthru
    _
  %v27 = vld [vmem:[%s0] sm:$0xff]
  %v28 = vunpack.c.l.bf16 %v27
  %v29 = vunpack.c.h.bf16 %v27
  %v30 = vld [vmem:[%s1] sm:$0xf]
  %v31 = vld [vmem:[%s1 + $0x4] sm:$0xf]
  %v32 = vld [vmem:[%s1 + $0x8] sm:$0xf]
  %v33 = vld [vmem:[%s1 + $0xc] sm:$0xf]
  %v34 = vld [vmem:[%s1 + $0x10] sm:$0xf]
  %v35 = vld [vmem:[%s1 + $0x14] sm:$0xf]
  %v36 = vld [vmem:[%s1 + $0x18] sm:$0xf]
  %v37 = vld [vmem:[%s1 + $0x1c] sm:$0xf]
  %v38 = vld [vmem:[%s1 + $0x20] sm:$0xf]
  %v39 = vld [vmem:[%s1 + $0x24] sm:$0xf]
  %v40 = vld [vmem:[%s1 + $0x28] sm:$0xf]
  %v41 = vld [vmem:[%s1 + $0x2c] sm:$0xf]
  %v42 = vld [vmem:[%s1 + $0x30] sm:$0xf]
  %v43 = vld [vmem:[%s1 + $0x34] sm:$0xf]
  %v44 = vld [vmem:[%s1 + $0x38] sm:$0xf]
  %v45 = vld [vmem:[%s1 + $0x3c] sm:$0xf]
  %v46 = vld [vmem:[%s1 + $0x40] sm:$0xf]
  %v47 = vld [vmem:[%s1 + $0x44] sm:$0xf]
  %v48 = vld [vmem:[%s1 + $0x48] sm:$0xf]
  %v49 = vld [vmem:[%s1 + $0x4c] sm:$0xf]
  %v50 = vld [vmem:[%s1 + $0x50] sm:$0xf]
  %v51 = vld [vmem:[%s1 + $0x54] sm:$0xf]
  %v52 = vld [vmem:[%s1 + $0x58] sm:$0xf]
  %v53 = vld [vmem:[%s1 + $0x5c] sm:$0xf]
  %v54 = vld [vmem:[%s1 + $0x60] sm:$0xf]
  %v55 = vld [vmem:[%s1 + $0x64] sm:$0xf]
  %v56 = vld [vmem:[%s1 + $0x68] sm:$0xf]
  %v57 = vld [vmem:[%s1 + $0x6c] sm:$0xf]
  %v58 = vld [vmem:[%s1 + $0x70] sm:$0xf]
  %v59 = vld [vmem:[%s1 + $0x74] sm:$0xf]
  %v60 = vld [vmem:[%s1 + $0x78] sm:$0xf]
  %v61 = vld [vmem:[%s1 + $0x7c] sm:$0xf]
  %v62 = vld [vmem:[%s2] sm:$0x1]
  %v64 = vlaneseq
  %v65 = vshrl.u32 %v64, 7
  %v66 = vsub.s32 0, %v65
  %v67 = vrot.slane %v62, %v66
  %v70 = vunpack.c.l.b16 %v27
  %v71 = vunpack.c.h.b16 %v27
  %v72 = vpack.c.b16 %v70, %v70
  %v73 = vpack.c.b16 %v71, %v71
  %v108 = vunpack.c.l.b16 %v30
  %v109 = vunpack.c.l.b16 %v31
  %v110 = vunpack.c.l.b16 %v32
  %v111 = vunpack.c.l.b16 %v33
  %v112 = vunpack.c.l.b16 %v34
  %v113 = vunpack.c.l.b16 %v35
  %v114 = vunpack.c.l.b16 %v36
  %v115 = vunpack.c.l.b16 %v37
  %v116 = vunpack.c.l.b16 %v38
  %v117 = vunpack.c.l.b16 %v39
  %v118 = vunpack.c.l.b16 %v40
  %v119 = vunpack.c.l.b16 %v41
  %v120 = vunpack.c.l.b16 %v42
  %v121 = vunpack.c.l.b16 %v43
  %v122 = vunpack.c.l.b16 %v44
  %v123 = vunpack.c.l.b16 %v45
  %v124 = vunpack.c.l.b16 %v46
  %v125 = vunpack.c.l.b16 %v47
  %v126 = vunpack.c.l.b16 %v48
  %v127 = vunpack.c.l.b16 %v49
  %v128 = vunpack.c.l.b16 %v50
  %v129 = vunpack.c.l.b16 %v51
  %v130 = vunpack.c.l.b16 %v52
  %v131 = vunpack.c.l.b16 %v53
  %v132 = vunpack.c.l.b16 %v54
  %v133 = vunpack.c.l.b16 %v55
  %v134 = vunpack.c.l.b16 %v56
  %v135 = vunpack.c.l.b16 %v57
  %v136 = vunpack.c.l.b16 %v58
  %v137 = vunpack.c.l.b16 %v59
  %v138 = vunpack.c.l.b16 %v60
  %v139 = vunpack.c.l.b16 %v61
  %v140 = vpack.c.b16 %v109, %v108
  %v141 = vpack.c.b16 %v111, %v110
  %v142 = vpack.c.b16 %v113, %v112
  %v143 = vpack.c.b16 %v115, %v114
  %v144 = vpack.c.b16 %v117, %v116
  %v145 = vpack.c.b16 %v119, %v118
  %v146 = vpack.c.b16 %v121, %v120
  %v147 = vpack.c.b16 %v123, %v122
  %v148 = vpack.c.b16 %v125, %v124
  %v149 = vpack.c.b16 %v127, %v126
  %v150 = vpack.c.b16 %v129, %v128
  %v151 = vpack.c.b16 %v131, %v130
  %v152 = vpack.c.b16 %v133, %v132
  %v153 = vpack.c.b16 %v135, %v134
  %v154 = vpack.c.b16 %v137, %v136
  %v155 = vpack.c.b16 %v139, %v138
  %172 = vmatprep.subr.bf16.mxu0 0
  %173 = vmatpush1.bf16.msra.mxu0 %v147
  %174 = vmatprep.subr.bf16.mxu0 0
  %175 = vmatpush1.bf16.msra.mxu0 %v146
  %176 = vmatprep.subr.bf16.mxu0 0
  %177 = vmatpush1.bf16.msra.mxu0 %v145
  %178 = vmatprep.subr.bf16.mxu0 0
  %179 = vmatpush1.bf16.msra.mxu0 %v144
  %180 = vmatprep.subr.bf16.mxu0 0
  %181 = vmatpush1.bf16.msra.mxu0 %v143
  %182 = vmatprep.subr.bf16.mxu0 0
  %183 = vmatpush1.bf16.msra.mxu0 %v142
  %184 = vmatprep.subr.bf16.mxu0 0
  %185 = vmatpush1.bf16.msra.mxu0 %v141
  %186 = vmatprep.subr.bf16.mxu0 0
  %187 = vmatpush1.bf16.msra.mxu0 %v140
  %188 = vmatprep.subr.bf16.mxu0 0
  %189 = vmatpush2.bf16.msra.mxu0 %v155
  %190 = vmatprep.subr.bf16.mxu0 0
  %191 = vmatpush2.bf16.msra.mxu0 %v154
  %192 = vmatprep.subr.bf16.mxu0 0
  %193 = vmatpush2.bf16.msra.mxu0 %v153
  %194 = vmatprep.subr.bf16.mxu0 0
  %195 = vmatpush2.bf16.msra.mxu0 %v152
  %196 = vmatprep.subr.bf16.mxu0 0
  %197 = vmatpush2.bf16.msra.mxu0 %v151
  %198 = vmatprep.subr.bf16.mxu0 0
  %199 = vmatpush2.bf16.msra.mxu0 %v150
  %200 = vmatprep.subr.bf16.mxu0 0
  %201 = vmatpush2.bf16.msra.mxu0 %v149
  %202 = vmatprep.subr.bf16.mxu0 0
  %203 = vmatpush2.bf16.msra.mxu0 %v148
  %204 = vmatprep.mubr.bf16.mxu0 %v73
  %205 = vmatmul.mubr.bf16.gmra.mxu0 %v72
  %v206 = vpop.f32.mrf.mxu0
  %v207 = vadd.f32 %v67, %v206
  %v208 = vpop.f32.mrf.mxu0
  %v209 = vpop.f32.mrf.mxu0
  %v210 = vpop.f32.mrf.mxu0
  %211 = vdwg.mxu0
  %v212 = vmax.f32 %v207, 0.0
  %v213 = vmul.f32 %v28, %v28
  %v214 = vmul.f32 %v29, %v29
  %v215 = vld [vmem:[%s3] sm:$0x3]
  %v217 = vlaneseq
  %v218 = vshrl.u32 %v217, 7
  %v219 = vsub.s32 0, %v218
  %v220 = vrot.slane %v215, %v219
  %v221 = vlaneseq
  %v222 = vshrl.u32 %v221, 7
  %v223 = vsub.s32 1, %v222
  %v224 = vrot.slane %v215, %v223
  %v227 = vmul.f32 %v213, %v220
  %v228 = vmul.f32 %v214, %v224
  %v229 = vadd.f32 %v227, %v228
  %230 = vadd.xlane.f32.xlu0 %v229
  %v231 = vpop.xlane.xlu0 %230
  %v232 = vmul.f32 %v207, %v207
  %234 = vrot.lane.b32.xlu0 %v232, 64
  %v235 = vpop.permute.xlu0 %234
  %vm237 = vcmask 64512
  %v238 = vsel %vm237, %v235, 0.0
  %239 = vadd.xlane.f32.xlu0 %v238
  %v240 = vpop.xlane.xlu0 %239
  %v241 = vsub.f32 %v240, %v231
  %v242 = vmul.f32 %v241, 0.5
  %v243 = vpack.c.bf16 %v212, %v212
  %v244 = vld [vmem:[%s4] sm:$0xf]
  %v245 = vld [vmem:[%s4 + $0x4] sm:$0xf]
  %v246 = vld [vmem:[%s4 + $0x8] sm:$0xf]
  %v247 = vld [vmem:[%s4 + $0xc] sm:$0xf]
  %v248 = vld [vmem:[%s4 + $0x10] sm:$0xf]
  %v249 = vld [vmem:[%s4 + $0x14] sm:$0xf]
  %v250 = vld [vmem:[%s4 + $0x18] sm:$0xf]
  %v251 = vld [vmem:[%s4 + $0x1c] sm:$0xf]
  %v252 = vld [vmem:[%s5] sm:$0x1]
  %v254 = vlaneseq
  %v255 = vshrl.u32 %v254, 7
  %v256 = vsub.s32 0, %v255
  %v257 = vrot.slane %v252, %v256
  %v267 = vunpack.c.l.b16 %v244
  %v268 = vunpack.c.l.b16 %v245
  %v269 = vunpack.c.l.b16 %v246
  %v270 = vunpack.c.l.b16 %v247
  %v271 = vunpack.c.l.b16 %v248
  %v272 = vunpack.c.l.b16 %v249
  %v273 = vunpack.c.l.b16 %v250
  %v274 = vunpack.c.l.b16 %v251
  %v275 = vpack.c.b16 %v268, %v267
  %v276 = vpack.c.b16 %v270, %v269
  %v277 = vpack.c.b16 %v272, %v271
  %v278 = vpack.c.b16 %v274, %v273
  %vm283 = vcmask 523264
  %v285 = vsel %vm283, %v243, 0
  %287 = vmatprep.subr.bf16.mxu0 0
  %288 = vmatpush1.bf16.msra.mxu0 0
  %289 = vmatprep.subr.bf16.mxu0 0
  %290 = vmatpush1.bf16.msra.mxu0 0
  %291 = vmatprep.subr.bf16.mxu0 0
  %292 = vmatpush1.bf16.msra.mxu0 0
  %293 = vmatprep.subr.bf16.mxu0 0
  %294 = vmatpush1.bf16.msra.mxu0 0
  %295 = vmatprep.subr.bf16.mxu0 0
  %296 = vmatpush1.bf16.msra.mxu0 %v278
  %297 = vmatprep.subr.bf16.mxu0 0
  %298 = vmatpush1.bf16.msra.mxu0 %v277
  %299 = vmatprep.subr.bf16.mxu0 0
  %300 = vmatpush1.bf16.msra.mxu0 %v276
  %301 = vmatprep.subr.bf16.mxu0 0
  %302 = vmatpush1.bf16.msra.mxu0 %v275
  %303 = vmatprep.subr.bf16.mxu0 0
  %304 = vmatpush2.bf16.msra.mxu0 0
  %305 = vmatprep.subr.bf16.mxu0 0
  %306 = vmatpush2.bf16.msra.mxu0 0
  %307 = vmatprep.subr.bf16.mxu0 0
  %308 = vmatpush2.bf16.msra.mxu0 0
  %309 = vmatprep.subr.bf16.mxu0 0
  %310 = vmatpush2.bf16.msra.mxu0 0
  %311 = vmatprep.subr.bf16.mxu0 0
  %312 = vmatpush2.bf16.msra.mxu0 0
  %313 = vmatprep.subr.bf16.mxu0 0
  %314 = vmatpush2.bf16.msra.mxu0 0
  %315 = vmatprep.subr.bf16.mxu0 0
  %316 = vmatpush2.bf16.msra.mxu0 0
  %317 = vmatprep.subr.bf16.mxu0 0
  %318 = vmatpush2.bf16.msra.mxu0 0
  %319 = vmatprep.mubr.bf16.mxu0 0
  %320 = vmatmul.mubr.bf16.gmra.mxu0 %v285
  %v321 = vpop.f32.mrf.mxu0
  %v322 = vadd.f32 %v257, %v321
  %v323 = vpop.f32.mrf.mxu0
  %v324 = vpop.f32.mrf.mxu0
  %v325 = vpop.f32.mrf.mxu0
  %326 = vdwg.mxu0
  %v327 = vmax.f32 %v322, 0.0
  %v328 = vld [vmem:[%s6] sm:$0x1]
  %v330 = vlaneseq
  %v331 = vshrl.u32 %v330, 7
  %v332 = vsub.s32 0, %v331
  %v333 = vrot.slane %v328, %v332
  %v335 = vmul.f32 %v327, %v333
  %336 = vadd.xlane.f32.xlu0 %v335
  %v337 = vpop.xlane.xlu0 %336
  %v338 = vadd.f32 %v207, %v242
  %v339 = vadd.f32 %v338, %v337
  %v340 = vxor.u32 %v339, 2147483648
  %v341 = vmul.f32 %v340, 1.442695
  %v342 = vpow.pop %v341
  %v343 = vadd.f32 %v342, 1.0
  %v344 = vrcp.pop %v343
  %v345 = vmul.f32 1.0, %v344
  %347 = vrot.lane.b32.xlu0 %v345, 56
  %v348 = vpop.permute.xlu0 %347
  %vm350 = vcmask 7168
  %351 = vst.msk [vmem:[%s7] sm:$0xff] %vm350, %v348
  // Predicated region
  $region30: #{forward.1} parent=0 // pred_check
    _
  $region31: #{forward.1} parent=0 // pred_check_branch
    %353 = sbr.rel (0) target = $region33
  $region32: #{forward.1} parent=0 // pred_region
    _
  $region33: #{forward.1} parent=0 // pred_fallthru
    _
  // Predicated region
  $region34: #{forward.1} parent=0 // pred_check
    _
  $region35: #{forward.1} parent=0 // pred_check_branch
    %355 = sbr.rel (0) target = $region37
  $region36: #{forward.1} parent=0 // pred_region
    _
  $region37: #{forward.1} parent=0 // pred_fallthru
    _

</llo_original>
